<compile_context>
chip_gen: v6e
topology: v6e:2x2x1
jax: 0.10.0
libtpu: 0.0.40
codegen_flags: <defaults>
</compile_context>

<pallas_src>
import functools

import jax
import jax.numpy as jnp
from jax import lax
from jax.experimental import pallas as pl
from jax.experimental.pallas import tpu as pltpu

_LANE = 128
_MIN_SUBLANE_BF16 = 16
_DEFAULT_TILE = 512
_LOG2E = 1.4426950408889634


def _round_up(x, m):
    return (x + m - 1) // m * m


def _qkv_proj_kernel(x_ref, wq_ref, wk_ref, wv_ref, q_ref, k_ref, v_ref):
    """Fused Q/K/V projection for one sequence tile (runs once per tile)."""
    x = x_ref[...]
    q_ref[...] = jnp.dot(x, wq_ref[...],
                         preferred_element_type=jnp.float32).astype(q_ref.dtype)
    k_ref[...] = jnp.dot(x, wk_ref[...],
                         preferred_element_type=jnp.float32).astype(k_ref.dtype)
    v_ref[...] = jnp.dot(x, wv_ref[...],
                         preferred_element_type=jnp.float32).astype(v_ref.dtype)


def _flash_attn_kernel(q_ref, k_ref, v_ref, *rest, has_mask):
    """One (query tile, KV tile) step of flash attention on precomputed Q/K/V.

    Scores are in log2 space: scale * log2(e) is already folded into W_query,
    so the softmax uses exp2 directly.
    """
    if has_mask:
        mask_ref, o_ref, m_sc, l_sc, acc_sc = rest
    else:
        o_ref, m_sc, l_sc, acc_sc = rest
    ki = pl.program_id(1)

    @pl.when(ki == 0)
    def _init():
        m_sc[...] = jnp.full_like(m_sc, -jnp.inf)
        l_sc[...] = jnp.zeros_like(l_sc)
        acc_sc[...] = jnp.zeros_like(acc_sc)

    # scores = q @ k^T via dot_general (contract last dims) -> no k.T transpose.
    s = lax.dot_general(q_ref[...], k_ref[...], (((1,), (1,)), ((), ())),
                        preferred_element_type=jnp.float32)  # (TQ, TKV), f32

    if has_mask:
        # Additive mask row (0 for real keys, -inf for sequence padding); only
        # present when seq is not tile-aligned, single VPU add per step.
        s = s + mask_ref[...]

    # Online (flash) softmax update in log2 space.
    m_prev = m_sc[...]
    m_new = jnp.maximum(m_prev, jnp.max(s, axis=-1, keepdims=True))
    # Guard against a fully-masked tile producing -inf - (-inf) = NaN (latent
    # hazard if this kernel is ever reused with arbitrary masks).
    m_new = jnp.maximum(m_new, -1e30)
    alpha = jnp.exp2(m_prev - m_new)
    p = jnp.exp2(s - m_new)
    l_sc[...] = alpha * l_sc[...] + jnp.sum(p, axis=-1, keepdims=True)
    acc_sc[...] = alpha * acc_sc[...] + jnp.dot(
        p.astype(v_ref.dtype), v_ref[...], preferred_element_type=jnp.float32)
    m_sc[...] = m_new

    @pl.when(ki == pl.num_programs(1) - 1)
    def _finalize():
        inv_l = pl.reciprocal(l_sc[...], approx=True)  # EUP vrcp
        o_ref[...] = (acc_sc[...] * inv_l).astype(o_ref.dtype)


def _vmem_limit(est_bytes):
    """Explicit VMEM request with headroom; stays below v7x's 64 MiB physical."""
    return int(min(max(2 * est_bytes, 16 * 1024 * 1024), 48 * 1024 * 1024))


def _self_attention_v2_impl(x, w_query, w_key, w_value, *, tile=_DEFAULT_TILE):
    """x: (seq, d_in); weights: (d_out, d_in) in nn.Linear layout -> (seq, d_out)."""
    orig_dtype = x.dtype
    seq, d_in = x.shape
    d_out = w_query.shape[0]

    compute_dtype = jnp.bfloat16  # MXU operands; f32 accumulation everywhere.

    # Fold softmax scale and log2(e) into W_query (free, done once under jit).
    scale = _LOG2E / (d_out ** 0.5)
    wq = (w_query.T.astype(jnp.float32) * scale).astype(compute_dtype)
    wk = w_key.T.astype(compute_dtype)
    wv = w_value.T.astype(compute_dtype)
    xc = x.astype(compute_dtype)

    # Lane-dense feature dims; sequence tiles are multiples of the bf16 minimum
    # sublane count (16); multi-tile runs use a 128-multiple tile so every
    # BlockSpec dim is (8,128)-legal.
    tile = _round_up(max(int(tile), _LANE), _LANE)
    d_in_p = _round_up(d_in, _LANE)
    d_out_p = _round_up(d_out, _LANE)
    t = min(tile, _round_up(seq, _MIN_SUBLANE_BF16))
    t = _round_up(t, _MIN_SUBLANE_BF16)
    seq_p = _round_up(seq, t)
    needs_mask = seq_p != seq
    n_seq = seq_p // t

    def _pad2(a, rows, cols):
        pr, pc = rows - a.shape[0], cols - a.shape[1]
        if pr == 0 and pc == 0:
            return a  # already aligned: skip the extra HBM round trip
        return jnp.pad(a, ((0, pr), (0, pc)))

    x_p = _pad2(xc, seq_p, d_in_p)
    wq_p = _pad2(wq, d_in_p, d_out_p)
    wk_p = _pad2(wk, d_in_p, d_out_p)
    wv_p = _pad2(wv, d_in_p, d_out_p)

    # ---------------- Stage 1: fused QKV projection (one pass over seq) -------
    c = 2  # bf16 itemsize
    proj_est = (2 * t * d_in_p * c                 # x tiles, double-buffered
                + 3 * 2 * d_in_p * d_out_p * c     # weights (2 bufs, conservative)
                + 3 * 2 * t * d_out_p * c)         # q/k/v tiles, double-buffered
    # TODO(synk): once pipeline_mode=pl.Buffered(1) is verified on the target
    # jax version, single-buffer the constant weight BlockSpecs to halve their
    # VMEM footprint for very large d_in*d_out on v7x.
    w_spec = pl.BlockSpec((d_in_p, d_out_p), lambda i: (0, 0))
    qkv_out_spec = pl.BlockSpec((t, d_out_p), lambda i: (i, 0))
    q_p, k_p, v_p = pl.pallas_call(
        _qkv_proj_kernel,
        out_shape=[jax.ShapeDtypeStruct((seq_p, d_out_p), compute_dtype)] * 3,
        grid_spec=pltpu.PrefetchScalarGridSpec(
            num_scalar_prefetch=0,
            grid=(n_seq,),
            in_specs=[pl.BlockSpec((t, d_in_p), lambda i: (i, 0)),
                      w_spec, w_spec, w_spec],
            out_specs=[qkv_out_spec, qkv_out_spec, qkv_out_spec],
        ),
        compiler_params=pltpu.CompilerParams(
            dimension_semantics=("parallel",),
            vmem_limit_bytes=_vmem_limit(proj_est),
        ),
    )(x_p, wq_p, wk_p, wv_p)

    # ---------------- Stage 2: flash attention over (qi, ki) tiles ------------
    attn_est = (3 * 2 * t * d_out_p * c                        # q/k/v tiles
                + 2 * t * d_out_p * jnp.dtype(orig_dtype).itemsize  # output
                + t * d_out_p * 4                              # f32 accumulator
                + 2 * t * _LANE * 4                            # m / l stats
                + 3 * t * t * 4                                # scores/probs temps
                + 2 * t * 4)                                   # mask row
    in_specs = [
        pl.BlockSpec((t, d_out_p), lambda qi, ki: (qi, 0)),  # Q tile
        pl.BlockSpec((t, d_out_p), lambda qi, ki: (ki, 0)),  # K tile
        pl.BlockSpec((t, d_out_p), lambda qi, ki: (ki, 0)),  # V tile
    ]
    inputs = [q_p, k_p, v_p]
    if needs_mask:
        col = jnp.arange(seq_p, dtype=jnp.int32)
        mask = jnp.where(col < seq, 0.0, -jnp.inf).astype(jnp.float32)[None, :]
        in_specs.append(pl.BlockSpec((1, t), lambda qi, ki: (0, ki)))
        inputs.append(mask)

    kernel = functools.partial(_flash_attn_kernel, has_mask=needs_mask)
    out_p = pl.pallas_call(
        kernel,
        out_shape=jax.ShapeDtypeStruct((seq_p, d_out_p), orig_dtype),
        grid_spec=pltpu.PrefetchScalarGridSpec(
            num_scalar_prefetch=0,
            grid=(n_seq, n_seq),  # (query tiles, KV tiles)
            in_specs=in_specs,
            out_specs=pl.BlockSpec((t, d_out_p), lambda qi, ki: (qi, 0)),
            scratch_shapes=[
                pltpu.VMEM((t, 1), jnp.float32),        # running max m (log2 space)
                pltpu.VMEM((t, 1), jnp.float32),        # running denom l
                pltpu.VMEM((t, d_out_p), jnp.float32),  # output accumulator
            ],
        ),
        compiler_params=pltpu.CompilerParams(
            dimension_semantics=("parallel", "arbitrary"),  # KV axis is the reduction
            vmem_limit_bytes=_vmem_limit(attn_est),
        ),
    )(*inputs)

    if seq_p != seq or d_out_p != d_out:
        out_p = out_p[:seq, :d_out]
    return out_p


# jit the wrapper so casts / padding / scale-fold fuse around the kernel calls.
self_attention_v2 = jax.jit(_self_attention_v2_impl, static_argnames=("tile",))
# TODO(synk): for many tiny (seq, d_out) attention instances (heads/sequences),
# add a leading batch grid axis marked "parallel" so one pallas_call amortizes
# launch + per-step pipeline overhead and feeds both v7x TensorCores.


def _reference(x, w_query, w_key, w_value):
    q = x @ w_query.T
    k = x @ w_key.T
    v = x @ w_value.T
    scores = q @ k.T
    weights = jax.nn.softmax(scores / (k.shape[-1] ** 0.5), axis=-1)
    return weights @ v


if __name__ == "__main__":
    key = jax.random.PRNGKey(0)
    # bf16 MXU operands -> compare against the f32 reference with a bf16-sized
    # tolerance.
    ATOL = RTOL = 2e-2

    # --- Test 1: exact shapes from the PyTorch spec (seq=6, d_in=3, d_out=4) ---
    x1 = jnp.array(
        [[0.43, 0.15, 0.89], [0.55, 0.87, 0.66], [0.57, 0.85, 0.64],
         [0.22, 0.58, 0.33], [0.77, 0.25, 0.10], [0.05, 0.80, 0.55]],
        dtype=jnp.float32)
    d_in1, d_out1 = 3, 4
    kq, kk, kv, key = jax.random.split(key, 4)
    b1 = 1.0 / (d_in1 ** 0.5)  # nn.Linear default init bound, qkv_bias=False
    wq1 = jax.random.uniform(kq, (d_out1, d_in1), jnp.float32, -b1, b1)
    wk1 = jax.random.uniform(kk, (d_out1, d_in1), jnp.float32, -b1, b1)
    wv1 = jax.random.uniform(kv, (d_out1, d_in1), jnp.float32, -b1, b1)

    out1 = jax.block_until_ready(self_attention_v2(x1, wq1, wk1, wv1))
    ref1 = _reference(x1, wq1, wk1, wv1)
    assert out1.shape == (6, d_out1), out1.shape
    assert jnp.allclose(out1, ref1, atol=ATOL, rtol=RTOL), float(
        jnp.max(jnp.abs(out1 - ref1)))

    # --- Test 2: multi-tile grid with sequence padding (online softmax + mask) ---
    seq2, d_in2, d_out2 = 320, 256, 128
    kx, kq, kk, kv, key = jax.random.split(key, 5)
    x2 = jax.random.uniform(kx, (seq2, d_in2), dtype=jnp.float32)
    b2 = 1.0 / (d_in2 ** 0.5)
    wq2 = jax.random.uniform(kq, (d_out2, d_in2), jnp.float32, -b2, b2)
    wk2 = jax.random.uniform(kk, (d_out2, d_in2), jnp.float32, -b2, b2)
    wv2 = jax.random.uniform(kv, (d_out2, d_in2), jnp.float32, -b2, b2)

    out2 = jax.block_until_ready(self_attention_v2(x2, wq2, wk2, wv2, tile=128))
    ref2 = _reference(x2, wq2, wk2, wv2)
    assert out2.shape == (seq2, d_out2), out2.shape
    assert jnp.allclose(out2, ref2, atol=ATOL, rtol=RTOL), float(
        jnp.max(jnp.abs(out2 - ref2)))

    # --- Test 3: multi-tile, tile-aligned sequence (mask-free kernel variant) ---
    seq3 = 256
    kx, key = jax.random.split(key)
    x3 = jax.random.uniform(kx, (seq3, d_in2), dtype=jnp.float32)
    out3 = jax.block_until_ready(self_attention_v2(x3, wq2, wk2, wv2, tile=128))
    ref3 = _reference(x3, wq2, wk2, wv2)
    assert out3.shape == (seq3, d_out2), out3.shape
    assert jnp.allclose(out3, ref3, atol=ATOL, rtol=RTOL), float(
        jnp.max(jnp.abs(out3 - ref3)))

    print("KERNEL_OK")
</pallas_src>

<mosaic_0001>
module attributes {stable_mosaic.version = 11 : i64} {
  func.func @_qkv_proj_kernel(%arg0: i32, %arg1: memref<16x128xbf16, #tpu.memory_space<vmem>>, %arg2: memref<128x128xbf16, #tpu.memory_space<vmem>>, %arg3: memref<128x128xbf16, #tpu.memory_space<vmem>>, %arg4: memref<128x128xbf16, #tpu.memory_space<vmem>>, %arg5: memref<16x128xbf16, #tpu.memory_space<vmem>>, %arg6: memref<16x128xbf16, #tpu.memory_space<vmem>>, %arg7: memref<16x128xbf16, #tpu.memory_space<vmem>>) attributes {dimension_semantics = [#tpu.dimension_semantics<parallel>], iteration_bounds = array<i64: 1>, scalar_prefetch = 0 : i64, scratch_operands = 0 : i64, tpu.core_type = #tpu.core_type<tc>, window_params = [{transform_indices = @transform_0, window_bounds = array<i64: 16, 128>}, {pipeline_mode = #tpu.pipeline_mode<synchronous>, transform_indices = @transform_1, window_bounds = array<i64: 128, 128>}, {pipeline_mode = #tpu.pipeline_mode<synchronous>, transform_indices = @transform_2, window_bounds = array<i64: 128, 128>}, {pipeline_mode = #tpu.pipeline_mode<synchronous>, transform_indices = @transform_3, window_bounds = array<i64: 128, 128>}, {transform_indices = @transform_4, window_bounds = array<i64: 16, 128>}, {transform_indices = @transform_5, window_bounds = array<i64: 16, 128>}, {transform_indices = @transform_6, window_bounds = array<i64: 16, 128>}]} {
    %c0 = arith.constant 0 : index
    %c0_0 = arith.constant 0 : index
    %0 = vector.load %arg1[%c0, %c0_0] : memref<16x128xbf16, #tpu.memory_space<vmem>>, vector<16x128xbf16>
    %c0_1 = arith.constant 0 : index
    %c0_2 = arith.constant 0 : index
    %1 = vector.load %arg2[%c0_1, %c0_2] : memref<128x128xbf16, #tpu.memory_space<vmem>>, vector<128x128xbf16>
    %cst = arith.constant dense<0.000000e+00> : vector<16x128xf32>
    %2 = tpu.matmul %0, %1, %cst {dimension_numbers = #tpu.dot_dimension_numbers<[1], [0], [0], [1], [0, 0, 1, 1], [], []>} : vector<16x128xbf16>, vector<128x128xbf16>, vector<16x128xf32> -> vector<16x128xf32>
    %3 = arith.truncf %2 : vector<16x128xf32> to vector<16x128xbf16>
    %c0_3 = arith.constant 0 : index
    %c0_4 = arith.constant 0 : index
    %4 = vector.load %arg5[%c0_3, %c0_4] : memref<16x128xbf16, #tpu.memory_space<vmem>>, vector<16x128xbf16>
    tpu.vector_store %arg5[%c0_3, %c0_4], %3 {strides = array<i32>} : memref<16x128xbf16, #tpu.memory_space<vmem>>, vector<16x128xbf16>,
    %c0_5 = arith.constant 0 : index
    %c0_6 = arith.constant 0 : index
    %5 = vector.load %arg3[%c0_5, %c0_6] : memref<128x128xbf16, #tpu.memory_space<vmem>>, vector<128x128xbf16>
    %cst_7 = arith.constant dense<0.000000e+00> : vector<16x128xf32>
    %6 = tpu.matmul %0, %5, %cst_7 {dimension_numbers = #tpu.dot_dimension_numbers<[1], [0], [0], [1], [0, 0, 1, 1], [], []>} : vector<16x128xbf16>, vector<128x128xbf16>, vector<16x128xf32> -> vector<16x128xf32>
    %7 = arith.truncf %6 : vector<16x128xf32> to vector<16x128xbf16>
    %c0_8 = arith.constant 0 : index
    %c0_9 = arith.constant 0 : index
    %8 = vector.load %arg6[%c0_8, %c0_9] : memref<16x128xbf16, #tpu.memory_space<vmem>>, vector<16x128xbf16>
    tpu.vector_store %arg6[%c0_8, %c0_9], %7 {strides = array<i32>} : memref<16x128xbf16, #tpu.memory_space<vmem>>, vector<16x128xbf16>,
    %c0_10 = arith.constant 0 : index
    %c0_11 = arith.constant 0 : index
    %9 = vector.load %arg4[%c0_10, %c0_11] : memref<128x128xbf16, #tpu.memory_space<vmem>>, vector<128x128xbf16>
    %cst_12 = arith.constant dense<0.000000e+00> : vector<16x128xf32>
    %10 = tpu.matmul %0, %9, %cst_12 {dimension_numbers = #tpu.dot_dimension_numbers<[1], [0], [0], [1], [0, 0, 1, 1], [], []>} : vector<16x128xbf16>, vector<128x128xbf16>, vector<16x128xf32> -> vector<16x128xf32>
    %11 = arith.truncf %10 : vector<16x128xf32> to vector<16x128xbf16>
    %c0_13 = arith.constant 0 : index
    %c0_14 = arith.constant 0 : index
    %12 = vector.load %arg7[%c0_13, %c0_14] : memref<16x128xbf16, #tpu.memory_space<vmem>>, vector<16x128xbf16>
    tpu.vector_store %arg7[%c0_13, %c0_14], %11 {strides = array<i32>} : memref<16x128xbf16, #tpu.memory_space<vmem>>, vector<16x128xbf16>,
    return
  }
  func.func @transform_0(%arg0: i32) -> (i32, i32) {
    %c0_i32 = arith.constant 0 : i32
    %c0_i32_0 = arith.constant 0 : i32
    return %arg0, %c0_i32 : i32, i32
  }
  func.func @transform_1(%arg0: i32) -> (i32, i32) {
    %c0_i32 = arith.constant 0 : i32
    %c0_i32_0 = arith.constant 0 : i32
    %c0_i32_1 = arith.constant 0 : i32
    return %c0_i32, %c0_i32_0 : i32, i32
  }
  func.func @transform_2(%arg0: i32) -> (i32, i32) {
    %c0_i32 = arith.constant 0 : i32
    %c0_i32_0 = arith.constant 0 : i32
    %c0_i32_1 = arith.constant 0 : i32
    return %c0_i32, %c0_i32_0 : i32, i32
  }
  func.func @transform_3(%arg0: i32) -> (i32, i32) {
    %c0_i32 = arith.constant 0 : i32
    %c0_i32_0 = arith.constant 0 : i32
    %c0_i32_1 = arith.constant 0 : i32
    return %c0_i32, %c0_i32_0 : i32, i32
  }
  func.func @transform_4(%arg0: i32) -> (i32, i32) {
    %c0_i32 = arith.constant 0 : i32
    %c0_i32_0 = arith.constant 0 : i32
    return %arg0, %c0_i32 : i32, i32
  }
  func.func @transform_5(%arg0: i32) -> (i32, i32) {
    %c0_i32 = arith.constant 0 : i32
    %c0_i32_0 = arith.constant 0 : i32
    return %arg0, %c0_i32 : i32, i32
  }
  func.func @transform_6(%arg0: i32) -> (i32, i32) {
    %c0_i32 = arith.constant 0 : i32
    %c0_i32_0 = arith.constant 0 : i32
    return %arg0, %c0_i32 : i32, i32
  }
}

module attributes {stable_mosaic.version = 11 : i64} {
  func.func @_flash_attn_kernel(%arg0: i32, %arg1: i32, %arg2: memref<16x128xbf16, #tpu.memory_space<vmem>>, %arg3: memref<16x128xbf16, #tpu.memory_space<vmem>>, %arg4: memref<16x128xbf16, #tpu.memory_space<vmem>>, %arg5: memref<1x16xf32, #tpu.memory_space<vmem>>, %arg6: memref<16x128xf32, #tpu.memory_space<vmem>>, %arg7: memref<16x1xf32, #tpu.memory_space<vmem>>, %arg8: memref<16x1xf32, #tpu.memory_space<vmem>>, %arg9: memref<16x128xf32, #tpu.memory_space<vmem>>) attributes {dimension_semantics = [#tpu.dimension_semantics<parallel>, #tpu.dimension_semantics<arbitrary>], iteration_bounds = array<i64: 1, 1>, scalar_prefetch = 0 : i64, scratch_operands = 3 : i64, tpu.core_type = #tpu.core_type<tc>, window_params = [{transform_indices = @transform_0, window_bounds = array<i64: 16, 128>}, {transform_indices = @transform_1, window_bounds = array<i64: 16, 128>}, {transform_indices = @transform_2, window_bounds = array<i64: 16, 128>}, {transform_indices = @transform_3, window_bounds = array<i64: 1, 16>}, {transform_indices = @transform_4, window_bounds = array<i64: 16, 128>}]} {
    %c0_i32 = arith.constant 0 : i32
    %0 = arith.cmpi eq, %arg1, %c0_i32 : i32
    %1 = arith.extui %0 : i1 to i32
    %c0_i32_0 = arith.constant 0 : i32
    %2 = arith.cmpi ne, %1, %c0_i32_0 : i32
    scf.if %2 {
      %cst_26 = arith.constant 0xFF800000 : f32
      %38 = vector.broadcast %cst_26 : f32 to vector<16x1xf32>
      %c0_27 = arith.constant 0 : index
      %c0_28 = arith.constant 0 : index
      %39 = vector.load %arg7[%c0_27, %c0_28] : memref<16x1xf32, #tpu.memory_space<vmem>>, vector<16x1xf32>
      tpu.vector_store %arg7[%c0_27, %c0_28], %38 {strides = array<i32>} : memref<16x1xf32, #tpu.memory_space<vmem>>, vector<16x1xf32>,
      %cst_29 = arith.constant 0.000000e+00 : f32
      %40 = vector.broadcast %cst_29 : f32 to vector<16x1xf32>
      %c0_30 = arith.constant 0 : index
      %c0_31 = arith.constant 0 : index
      %41 = vector.load %arg8[%c0_30, %c0_31] : memref<16x1xf32, #tpu.memory_space<vmem>>, vector<16x1xf32>
      tpu.vector_store %arg8[%c0_30, %c0_31], %40 {strides = array<i32>} : memref<16x1xf32, #tpu.memory_space<vmem>>, vector<16x1xf32>,
      %cst_32 = arith.constant 0.000000e+00 : f32
      %42 = vector.broadcast %cst_32 : f32 to vector<16x128xf32>
      %c0_33 = arith.constant 0 : index
      %c0_34 = arith.constant 0 : index
      %43 = vector.load %arg9[%c0_33, %c0_34] : memref<16x128xf32, #tpu.memory_space<vmem>>, vector<16x128xf32>
      tpu.vector_store %arg9[%c0_33, %c0_34], %42 {strides = array<i32>} : memref<16x128xf32, #tpu.memory_space<vmem>>, vector<16x128xf32>,
    } else {
    }
    %c0 = arith.constant 0 : index
    %c0_1 = arith.constant 0 : index
    %3 = vector.load %arg2[%c0, %c0_1] : memref<16x128xbf16, #tpu.memory_space<vmem>>, vector<16x128xbf16>
    %c0_2 = arith.constant 0 : index
    %c0_3 = arith.constant 0 : index
    %4 = vector.load %arg3[%c0_2, %c0_3] : memref<16x128xbf16, #tpu.memory_space<vmem>>, vector<16x128xbf16>
    %cst = arith.constant dense<0.000000e+00> : vector<16x16xf32>
    %5 = tpu.matmul %3, %4, %cst {dimension_numbers = #tpu.dot_dimension_numbers<[1], [1], [0], [0], [0, 0, 1, 0], [], []>} : vector<16x128xbf16>, vector<16x128xbf16>, vector<16x16xf32> -> vector<16x16xf32>
    %c0_4 = arith.constant 0 : index
    %c0_5 = arith.constant 0 : index
    %6 = vector.load %arg5[%c0_4, %c0_5] : memref<1x16xf32, #tpu.memory_space<vmem>>, vector<1x16xf32>
    %7 = vector.broadcast %6 : vector<1x16xf32> to vector<16x16xf32>
    %8 = arith.addf %5, %7 : vector<16x16xf32>
    %c0_6 = arith.constant 0 : index
    %c0_7 = arith.constant 0 : index
    %9 = vector.load %arg7[%c0_6, %c0_7] : memref<16x1xf32, #tpu.memory_space<vmem>>, vector<16x1xf32>
    %cst_8 = arith.constant dense<0xFF800000> : vector<16xf32>
    %10 = vector.multi_reduction <maximumf>, %8, %cst_8 [1] : vector<16x16xf32> to vector<16xf32>
    %11 = vector.shape_cast %10 : vector<16xf32> to vector<16x1xf32>
    %12 = arith.maximumf %9, %11 : vector<16x1xf32>
    %cst_9 = arith.constant -1.000000e+30 : f32
    %13 = vector.broadcast %cst_9 : f32 to vector<16x1xf32>
    %14 = arith.maximumf %12, %13 : vector<16x1xf32>
    %15 = arith.subf %9, %14 : vector<16x1xf32>
    %16 = math.exp2 %15 : vector<16x1xf32>
    %17 = vector.broadcast %14 : vector<16x1xf32> to vector<16x16xf32>
    %18 = arith.subf %8, %17 : vector<16x16xf32>
    %19 = math.exp2 %18 : vector<16x16xf32>
    %c0_10 = arith.constant 0 : index
    %c0_11 = arith.constant 0 : index
    %20 = vector.load %arg8[%c0_10, %c0_11] : memref<16x1xf32, #tpu.memory_space<vmem>>, vector<16x1xf32>
    %21 = arith.mulf %16, %20 : vector<16x1xf32>
    %cst_12 = arith.constant dense<0.000000e+00> : vector<16xf32>
    %22 = vector.multi_reduction <add>, %19, %cst_12 [1] : vector<16x16xf32> to vector<16xf32>
    %23 = vector.shape_cast %22 : vector<16xf32> to vector<16x1xf32>
    %24 = arith.addf %21, %23 : vector<16x1xf32>
    %c0_13 = arith.constant 0 : index
    %c0_14 = arith.constant 0 : index
    %25 = vector.load %arg8[%c0_13, %c0_14] : memref<16x1xf32, #tpu.memory_space<vmem>>, vector<16x1xf32>
    tpu.vector_store %arg8[%c0_13, %c0_14], %24 {strides = array<i32>} : memref<16x1xf32, #tpu.memory_space<vmem>>, vector<16x1xf32>,
    %c0_15 = arith.constant 0 : index
    %c0_16 = arith.constant 0 : index
    %26 = vector.load %arg9[%c0_15, %c0_16] : memref<16x128xf32, #tpu.memory_space<vmem>>, vector<16x128xf32>
    %27 = vector.broadcast %16 : vector<16x1xf32> to vector<16x128xf32>
    %28 = arith.mulf %27, %26 : vector<16x128xf32>
    %29 = arith.truncf %19 : vector<16x16xf32> to vector<16x16xbf16>
    %c0_17 = arith.constant 0 : index
    %c0_18 = arith.constant 0 : index
    %30 = vector.load %arg4[%c0_17, %c0_18] : memref<16x128xbf16, #tpu.memory_space<vmem>>, vector<16x128xbf16>
    %cst_19 = arith.constant dense<0.000000e+00> : vector<16x128xf32>
    %31 = tpu.matmul %29, %30, %cst_19 {dimension_numbers = #tpu.dot_dimension_numbers<[1], [0], [0], [1], [0, 0, 1, 1], [], []>} : vector<16x16xbf16>, vector<16x128xbf16>, vector<16x128xf32> -> vector<16x128xf32>
    %32 = arith.addf %28, %31 : vector<16x128xf32>
    %c0_20 = arith.constant 0 : index
    %c0_21 = arith.constant 0 : index
    %33 = vector.load %arg9[%c0_20, %c0_21] : memref<16x128xf32, #tpu.memory_space<vmem>>, vector<16x128xf32>
    tpu.vector_store %arg9[%c0_20, %c0_21], %32 {strides = array<i32>} : memref<16x128xf32, #tpu.memory_space<vmem>>, vector<16x128xf32>,
    %c0_22 = arith.constant 0 : index
    %c0_23 = arith.constant 0 : index
    %34 = vector.load %arg7[%c0_22, %c0_23] : memref<16x1xf32, #tpu.memory_space<vmem>>, vector<16x1xf32>
    tpu.vector_store %arg7[%c0_22, %c0_23], %14 {strides = array<i32>} : memref<16x1xf32, #tpu.memory_space<vmem>>, vector<16x1xf32>,
    %c0_i32_24 = arith.constant 0 : i32
    %35 = arith.cmpi eq, %arg1, %c0_i32_24 : i32
    %36 = arith.extui %35 : i1 to i32
    %c0_i32_25 = arith.constant 0 : i32
    %37 = arith.cmpi ne, %36, %c0_i32_25 : i32
    scf.if %37 {
      %c0_26 = arith.constant 0 : index
      %c0_27 = arith.constant 0 : index
      %38 = vector.load %arg8[%c0_26, %c0_27] : memref<16x1xf32, #tpu.memory_space<vmem>>, vector<16x1xf32>
      %39 = tpu.reciprocal %38 {approx = true} : vector<16x1xf32> -> vector<16x1xf32>
      %c0_28 = arith.constant 0 : index
      %c0_29 = arith.constant 0 : index
      %40 = vector.load %arg9[%c0_28, %c0_29] : memref<16x128xf32, #tpu.memory_space<vmem>>, vector<16x128xf32>
      %41 = vector.broadcast %39 : vector<16x1xf32> to vector<16x128xf32>
      %42 = arith.mulf %40, %41 : vector<16x128xf32>
      %c0_30 = arith.constant 0 : index
      %c0_31 = arith.constant 0 : index
      %43 = vector.load %arg6[%c0_30, %c0_31] : memref<16x128xf32, #tpu.memory_space<vmem>>, vector<16x128xf32>
      tpu.vector_store %arg6[%c0_30, %c0_31], %42 {strides = array<i32>} : memref<16x128xf32, #tpu.memory_space<vmem>>, vector<16x128xf32>,
    } else {
    }
    return
  }
  func.func @transform_0(%arg0: i32, %arg1: i32) -> (i32, i32) {
    %c0_i32 = arith.constant 0 : i32
    %c0_i32_0 = arith.constant 0 : i32
    return %arg0, %c0_i32 : i32, i32
  }
  func.func @transform_1(%arg0: i32, %arg1: i32) -> (i32, i32) {
    %c0_i32 = arith.constant 0 : i32
    %c0_i32_0 = arith.constant 0 : i32
    return %arg1, %c0_i32 : i32, i32
  }
  func.func @transform_2(%arg0: i32, %arg1: i32) -> (i32, i32) {
    %c0_i32 = arith.constant 0 : i32
    %c0_i32_0 = arith.constant 0 : i32
    return %arg1, %c0_i32 : i32, i32
  }
  func.func @transform_3(%arg0: i32, %arg1: i32) -> (i32, i32) {
    %c0_i32 = arith.constant 0 : i32
    %c0_i32_0 = arith.constant 0 : i32
    return %c0_i32, %arg1 : i32, i32
  }
  func.func @transform_4(%arg0: i32, %arg1: i32) -> (i32, i32) {
    %c0_i32 = arith.constant 0 : i32
    %c0_i32_0 = arith.constant 0 : i32
    return %arg0, %c0_i32 : i32, i32
  }
}

</mosaic_0001>

<llo_original>
// kernel: _self_attention_v2_impl.3
$region0: #{_self_attention_v2_impl.3}
  #allocation0 [shape = 'u32[]', space=smem, size = 0x4, offset = 0x4, fixed_abs, tag = 'smem constant byte address 0x4 - core index']
  #allocation1 [shape = 'u32[144,128]{1,0:T(1,128)}', space=vmem, size = 0x12000, scoped, tag = 'internal scratch']
  #allocation2 [shape = 'f32[16,1]{1,0:T(8,128)}', space=vmem, size = 0x2000, scoped, tag = 'scratch operand']
  #allocation3 [shape = 'f32[16,1]{1,0:T(8,128)}', space=vmem, size = 0x2000, scoped, tag = 'scratch operand']
  #allocation4 [shape = 'f32[16,128]{1,0:T(8,128)}', space=vmem, size = 0x2000, scoped, tag = 'scratch operand']
  %s0 = inlined_call_operand.vmem [shape: bf16[16,128], index: 0, kind: input, shape index: {}]
  %s1 = inlined_call_operand.vmem [shape: bf16[16,128], index: 1, kind: input, shape index: {}]
  %s2 = inlined_call_operand.vmem [shape: bf16[16,128], index: 2, kind: input, shape index: {}]
  %s3 = inlined_call_operand.vmem [shape: f32[1,16], index: 3, kind: input, shape index: {}]
  %s4 = inlined_call_operand.vmem [shape: f32[16,128], index: 4, kind: output, shape index: {}]
  %s5 = sld [smem:[#allocation0]]
  $region34: #{_self_attention_v2_impl.3} parent=0
    _
  %s7 = ssub.s32 1, %s5
  %s8 = scalar_select 0, %s7, %s5
  // Predicated region
  $region2: #{_self_attention_v2_impl.3} parent=0 // pred_check
    _
  $region3: #{_self_attention_v2_impl.3} parent=0 // pred_check_branch
    %10 = sbr.rel (0) target = $region5
  $region4: #{_self_attention_v2_impl.3} parent=0 // pred_region
    _
  $region5: #{_self_attention_v2_impl.3} parent=0 // pred_fallthru
    _
  // Predicated region
  $region6: #{_self_attention_v2_impl.3} parent=0 // pred_check
    _
  $region7: #{_self_attention_v2_impl.3} parent=0 // pred_check_branch
    %12 = sbr.rel (0) target = $region9
  $region8: #{_self_attention_v2_impl.3} parent=0 // pred_region
    _
  $region9: #{_self_attention_v2_impl.3} parent=0 // pred_fallthru
    _
  // Predicated region
  $region10: #{_self_attention_v2_impl.3} parent=0 // pred_check
    _
  $region11: #{_self_attention_v2_impl.3} parent=0 // pred_check_branch
    %14 = sbr.rel (0) target = $region13
  $region12: #{_self_attention_v2_impl.3} parent=0 // pred_region
    _
  $region13: #{_self_attention_v2_impl.3} parent=0 // pred_fallthru
    _
  // Predicated region
  $region14: #{_self_attention_v2_impl.3} parent=0 // pred_check
    _
  $region15: #{_self_attention_v2_impl.3} parent=0 // pred_check_branch
    %16 = sbr.rel (0) target = $region17
  $region16: #{_self_attention_v2_impl.3} parent=0 // pred_region
    _
  $region17: #{_self_attention_v2_impl.3} parent=0 // pred_fallthru
    _
  %p18 = scmp.eq.s32.totalorder 0, 0
  // Predicated region
  $region18: #{_self_attention_v2_impl.3} parent=0 // pred_check
    %p19 = pneg %p18
  $region19: #{_self_attention_v2_impl.3} parent=0 // pred_check_branch
    %21 = sbr.rel (%p19) target = $region21
  $region20: #{_self_attention_v2_impl.3} parent=0 // pred_region
    %vm22 = vcmask 7168
    %23 = vst.msk [vmem:[#allocation2] sm:$0xff] %vm22, -inf
    %24 = vst.msk [vmem:[#allocation2 + $0x8] sm:$0xff] %vm22, -inf
    %25 = vst.msk [vmem:[#allocation3] sm:$0xff] %vm22, 0.0
    %26 = vst.msk [vmem:[#allocation3 + $0x8] sm:$0xff] %vm22, 0.0
    %27 = vst [vmem:[#allocation4] sm:$0xff] 0.0
    %28 = vst [vmem:[#allocation4 + $0x8] sm:$0xff] 0.0
  $region21: #{_self_attention_v2_impl.3} parent=0 // pred_fallthru
    _
  %v29 = vld [vmem:[%s0] sm:$0xf]
  %v30 = vld [vmem:[%s0 + $0x4] sm:$0xf]
  %v31 = vld [vmem:[%s1] sm:$0xf]
  %v32 = vld [vmem:[%s1 + $0x4] sm:$0xf]
  %v33 = vld [vmem:[%s3] sm:$0x1]
  %v35 = vlaneseq
  %v36 = vshrl.u32 %v35, 7
  %v37 = vsub.s32 0, %v36
  %v38 = vrot.slane %v33, %v37
  %v42 = vunpack.c.l.b16 %v29
  %v43 = vunpack.c.l.b16 %v30
  %v44 = vpack.c.b16 %v43, %v42
  %v48 = vunpack.c.l.b16 %v31
  %v49 = vunpack.c.l.b16 %v32
  %v50 = vpack.c.b16 %v49, %v48
  %52 = vmatprep.subr.bf16.mxu0 0
  %53 = vmatpush1.bf16.xpose.msra.mxu0 0
  %54 = vmatprep.subr.bf16.mxu0 0
  %55 = vmatpush1.bf16.xpose.msra.mxu0 0
  %56 = vmatprep.subr.bf16.mxu0 0
  %57 = vmatpush1.bf16.xpose.msra.mxu0 0
  %58 = vmatprep.subr.bf16.mxu0 0
  %59 = vmatpush1.bf16.xpose.msra.mxu0 0
  %60 = vmatprep.subr.bf16.mxu0 0
  %61 = vmatpush1.bf16.xpose.msra.mxu0 0
  %62 = vmatprep.subr.bf16.mxu0 0
  %63 = vmatpush1.bf16.xpose.msra.mxu0 0
  %64 = vmatprep.subr.bf16.mxu0 0
  %65 = vmatpush1.bf16.xpose.msra.mxu0 0
  %66 = vmatprep.subr.bf16.mxu0 0
  %67 = vmatpush1.bf16.xpose.msra.mxu0 %v50
  %68 = vmatprep.subr.bf16.mxu0 0
  %69 = vmatpush2.bf16.xpose.msra.mxu0 0
  %70 = vmatprep.subr.bf16.mxu0 0
  %71 = vmatpush2.bf16.xpose.msra.mxu0 0
  %72 = vmatprep.subr.bf16.mxu0 0
  %73 = vmatpush2.bf16.xpose.msra.mxu0 0
  %74 = vmatprep.subr.bf16.mxu0 0
  %75 = vmatpush2.bf16.xpose.msra.mxu0 0
  %76 = vmatprep.subr.bf16.mxu0 0
  %77 = vmatpush2.bf16.xpose.msra.mxu0 0
  %78 = vmatprep.subr.bf16.mxu0 0
  %79 = vmatpush2.bf16.xpose.msra.mxu0 0
  %80 = vmatprep.subr.bf16.mxu0 0
  %81 = vmatpush2.bf16.xpose.msra.mxu0 0
  %82 = vmatprep.subr.bf16.mxu0 0
  %83 = vmatpush2.bf16.xpose.msra.mxu0 0
  %84 = vmatprep.mubr.bf16.mxu0 0
  %85 = vmatmul.mubr.bf16.gmra.mxu0 %v44
  %v86 = vpop.f32.mrf.mxu0
  %v87 = vadd.f32 %v38, %v86
  %v88 = vpop.f32.mrf.mxu0
  %v89 = vpop.f32.mrf.mxu0
  %v90 = vadd.f32 %v38, %v89
  %v91 = vpop.f32.mrf.mxu0
  %92 = vdwg.mxu0
  %v93 = vld [vmem:[#allocation2] sm:$0xff]
  %v94 = vld [vmem:[#allocation2 + $0x8] sm:$0xff]
  %vm95 = vcmask 130048
  %v96 = vsel %vm95, %v87, -inf
  %97 = vmax.xlane.f32.xlu0 %v96
  %v98 = vpop.xlane.xlu0 %97
  %v99 = vsel %vm95, %v90, -inf
  %100 = vmax.xlane.f32.xlu0 %v99
  %v101 = vpop.xlane.xlu0 %100
  %v102 = vmax.f32 %v93, %v98
  %v103 = vmax.f32 %v94, %v101
  %v104 = vmax.f32 %v102, -1e+30
  %v105 = vmax.f32 %v103, -1e+30
  %v106 = vsub.f32 %v93, %v104
  %v107 = vsub.f32 %v94, %v105
  %v108 = vpow.pop %v106
  %v109 = vpow.pop %v107
  %111 = vset.pattern.permute.xlu0 0
  %112 = vperm.xlu0 %111, %v104
  %v113 = vpop.permute.xlu0 %112
  %116 = vset.pattern.permute.xlu0 0
  %117 = vperm.xlu0 %116, %v105
  %v118 = vpop.permute.xlu0 %117
  %v120 = vsub.f32 %v87, %v113
  %v121 = vsub.f32 %v90, %v118
  %v122 = vpow.pop %v120
  %v123 = vpow.pop %v121
  %v124 = vld [vmem:[#allocation3] sm:$0xff]
  %v125 = vld [vmem:[#allocation3 + $0x8] sm:$0xff]
  %v126 = vmul.f32 %v108, %v124
  %v127 = vmul.f32 %v109, %v125
  %v128 = vsel %vm95, %v122, 0.0
  %129 = vadd.xlane.f32.xlu0 %v128
  %v130 = vpop.xlane.xlu0 %129
  %v131 = vsel %vm95, %v123, 0.0
  %132 = vadd.xlane.f32.xlu0 %v131
  %v133 = vpop.xlane.xlu0 %132
  %v134 = vadd.f32 %v126, %v130
  %v135 = vadd.f32 %v127, %v133
  %vm136 = vcmask 7168
  %137 = vst.msk [vmem:[#allocation3] sm:$0xff] %vm136, %v134
  %138 = vst.msk [vmem:[#allocation3 + $0x8] sm:$0xff] %vm136, %v135
  %v139 = vld [vmem:[#allocation4] sm:$0xff]
  %v140 = vld [vmem:[#allocation4 + $0x8] sm:$0xff]
  %142 = vset.pattern.permute.xlu0 0
  %143 = vperm.xlu0 %142, %v108
  %v144 = vpop.permute.xlu0 %143
  %147 = vset.pattern.permute.xlu0 0
  %148 = vperm.xlu0 %147, %v109
  %v149 = vpop.permute.xlu0 %148
  %v151 = vmul.f32 %v144, %v139
  %v152 = vmul.f32 %v149, %v140
  %v153 = vpack.c.bf16 %v123, %v122
  %v154 = vld [vmem:[%s2] sm:$0xf]
  %v155 = vld [vmem:[%s2 + $0x4] sm:$0xf]
  %v158 = vunpack.c.l.b16 %v154
  %v159 = vunpack.c.l.b16 %v155
  %v160 = vpack.c.b16 %v159, %v158
  %v163 = vsel %vm95, %v153, 0
  %165 = vmatprep.subr.bf16.mxu0 0
  %166 = vmatpush1.bf16.msra.mxu0 0
  %167 = vmatprep.subr.bf16.mxu0 0
  %168 = vmatpush1.bf16.msra.mxu0 0
  %169 = vmatprep.subr.bf16.mxu0 0
  %170 = vmatpush1.bf16.msra.mxu0 0
  %171 = vmatprep.subr.bf16.mxu0 0
  %172 = vmatpush1.bf16.msra.mxu0 0
  %173 = vmatprep.subr.bf16.mxu0 0
  %174 = vmatpush1.bf16.msra.mxu0 0
  %175 = vmatprep.subr.bf16.mxu0 0
  %176 = vmatpush1.bf16.msra.mxu0 0
  %177 = vmatprep.subr.bf16.mxu0 0
  %178 = vmatpush1.bf16.msra.mxu0 0
  %179 = vmatprep.subr.bf16.mxu0 0
  %180 = vmatpush1.bf16.msra.mxu0 %v160
  %181 = vmatprep.subr.bf16.mxu0 0
  %182 = vmatpush2.bf16.msra.mxu0 0
  %183 = vmatprep.subr.bf16.mxu0 0
  %184 = vmatpush2.bf16.msra.mxu0 0
  %185 = vmatprep.subr.bf16.mxu0 0
  %186 = vmatpush2.bf16.msra.mxu0 0
  %187 = vmatprep.subr.bf16.mxu0 0
  %188 = vmatpush2.bf16.msra.mxu0 0
  %189 = vmatprep.subr.bf16.mxu0 0
  %190 = vmatpush2.bf16.msra.mxu0 0
  %191 = vmatprep.subr.bf16.mxu0 0
  %192 = vmatpush2.bf16.msra.mxu0 0
  %193 = vmatprep.subr.bf16.mxu0 0
  %194 = vmatpush2.bf16.msra.mxu0 0
  %195 = vmatprep.subr.bf16.mxu0 0
  %196 = vmatpush2.bf16.msra.mxu0 0
  %197 = vmatprep.mubr.bf16.mxu0 0
  %198 = vmatmul.mubr.bf16.gmra.mxu0 %v163
  %v199 = vpop.f32.mrf.mxu0
  %v200 = vadd.f32 0.0, %v199
  %v201 = vpop.f32.mrf.mxu0
  %v202 = vpop.f32.mrf.mxu0
  %v203 = vadd.f32 0.0, %v202
  %v204 = vpop.f32.mrf.mxu0
  %205 = vdwg.mxu0
  %v206 = vadd.f32 %v151, %v200
  %v207 = vadd.f32 %v152, %v203
  %208 = vst [vmem:[#allocation4] sm:$0xff] %v206
  %209 = vst [vmem:[#allocation4 + $0x8] sm:$0xff] %v207
  %210 = vst.msk [vmem:[#allocation2] sm:$0xff] %vm136, %v104
  %211 = vst.msk [vmem:[#allocation2 + $0x8] sm:$0xff] %vm136, %v105
  // Predicated region
  $region22: #{_self_attention_v2_impl.3} parent=0 // pred_check
    %p212 = pneg %p18
  $region23: #{_self_attention_v2_impl.3} parent=0 // pred_check_branch
    %214 = sbr.rel (%p212) target = $region25
  $region24: #{_self_attention_v2_impl.3} parent=0 // pred_region
    %v215 = vld [vmem:[#allocation3] sm:$0xff]
    %v216 = vld [vmem:[#allocation3 + $0x8] sm:$0xff]
    %v217 = vrcp.pop %v215
    %v218 = vrcp.pop %v216
    %v219 = vld [vmem:[#allocation4] sm:$0xff]
    %v220 = vld [vmem:[#allocation4 + $0x8] sm:$0xff]
    %222 = vset.pattern.permute.xlu0 0
    %223 = vperm.xlu0 %222, %v217
    %v224 = vpop.permute.xlu0 %223
    %227 = vset.pattern.permute.xlu0 0
    %228 = vperm.xlu0 %227, %v218
    %v229 = vpop.permute.xlu0 %228
    %v231 = vmul.f32 %v219, %v224
    %v232 = vmul.f32 %v220, %v229
    %233 = vst [vmem:[%s4] sm:$0xff] %v231
    %234 = vst [vmem:[%s4 + $0x8] sm:$0xff] %v232
  $region25: #{_self_attention_v2_impl.3} parent=0 // pred_fallthru
    _
  // Predicated region
  $region26: #{_self_attention_v2_impl.3} parent=0 // pred_check
    _
  $region27: #{_self_attention_v2_impl.3} parent=0 // pred_check_branch
    %236 = sbr.rel (0) target = $region29
  $region28: #{_self_attention_v2_impl.3} parent=0 // pred_region
    _
  $region29: #{_self_attention_v2_impl.3} parent=0 // pred_fallthru
    _
  // Predicated region
  $region30: #{_self_attention_v2_impl.3} parent=0 // pred_check
    _
  $region31: #{_self_attention_v2_impl.3} parent=0 // pred_check_branch
    %238 = sbr.rel (0) target = $region33
  $region32: #{_self_attention_v2_impl.3} parent=0 // pred_region
    _
  $region33: #{_self_attention_v2_impl.3} parent=0 // pred_fallthru
    _

// kernel: _self_attention_v2_impl.2
$region0: #{_self_attention_v2_impl.2}
  #allocation0 [shape = 'u32[]', space=smem, size = 0x4, offset = 0x4, fixed_abs, tag = 'smem constant byte address 0x4 - core index']
  #allocation1 [shape = 'u32[144,128]{1,0:T(1,128)}', space=vmem, size = 0x12000, scoped, tag = 'internal scratch']
  %s0 = inlined_call_operand.vmem [shape: bf16[16,128], index: 0, kind: input, shape index: {}]
  %s1 = inlined_call_operand.vmem [shape: bf16[128,128], index: 1, kind: input, shape index: {}]
  %s2 = inlined_call_operand.vmem [shape: bf16[128,128], index: 2, kind: input, shape index: {}]
  %s3 = inlined_call_operand.vmem [shape: bf16[128,128], index: 3, kind: input, shape index: {}]
  %s4 = inlined_call_operand.vmem [shape: bf16[16,128], index: 4, kind: output, shape index: {0}]
  %s5 = inlined_call_operand.vmem [shape: bf16[16,128], index: 5, kind: output, shape index: {1}]
  %s6 = inlined_call_operand.vmem [shape: bf16[16,128], index: 6, kind: output, shape index: {2}]
  %7 = xla_tuple %s4, %s5, %s6
  %s8 = sld [smem:[#allocation0]]
  $region42: #{_self_attention_v2_impl.2} parent=0
    _
  %s10 = ssub.s32 1, %s8
  %s11 = scalar_select 0, %s10, %s8
  // Predicated region
  $region2: #{_self_attention_v2_impl.2} parent=0 // pred_check
    _
  $region3: #{_self_attention_v2_impl.2} parent=0 // pred_check_branch
    %13 = sbr.rel (0) target = $region5
  $region4: #{_self_attention_v2_impl.2} parent=0 // pred_region
    _
  $region5: #{_self_attention_v2_impl.2} parent=0 // pred_fallthru
    _
  // Predicated region
  $region6: #{_self_attention_v2_impl.2} parent=0 // pred_check
    _
  $region7: #{_self_attention_v2_impl.2} parent=0 // pred_check_branch
    %15 = sbr.rel (0) target = $region9
  $region8: #{_self_attention_v2_impl.2} parent=0 // pred_region
    _
  $region9: #{_self_attention_v2_impl.2} parent=0 // pred_fallthru
    _
  // Predicated region
  $region10: #{_self_attention_v2_impl.2} parent=0 // pred_check
    _
  $region11: #{_self_attention_v2_impl.2} parent=0 // pred_check_branch
    %17 = sbr.rel (0) target = $region13
  $region12: #{_self_attention_v2_impl.2} parent=0 // pred_region
    _
  $region13: #{_self_attention_v2_impl.2} parent=0 // pred_fallthru
    _
  // Predicated region
  $region14: #{_self_attention_v2_impl.2} parent=0 // pred_check
    _
  $region15: #{_self_attention_v2_impl.2} parent=0 // pred_check_branch
    %19 = sbr.rel (0) target = $region17
  $region16: #{_self_attention_v2_impl.2} parent=0 // pred_region
    _
  $region17: #{_self_attention_v2_impl.2} parent=0 // pred_fallthru
    _
  %v21 = vld [vmem:[%s0] sm:$0xf]
  %v22 = vld [vmem:[%s0 + $0x4] sm:$0xf]
  %v23 = vld [vmem:[%s1] sm:$0xf]
  %v24 = vld [vmem:[%s1 + $0x4] sm:$0xf]
  %v25 = vld [vmem:[%s1 + $0x8] sm:$0xf]
  %v26 = vld [vmem:[%s1 + $0xc] sm:$0xf]
  %v27 = vld [vmem:[%s1 + $0x10] sm:$0xf]
  %v28 = vld [vmem:[%s1 + $0x14] sm:$0xf]
  %v29 = vld [vmem:[%s1 + $0x18] sm:$0xf]
  %v30 = vld [vmem:[%s1 + $0x1c] sm:$0xf]
  %v31 = vld [vmem:[%s1 + $0x20] sm:$0xf]
  %v32 = vld [vmem:[%s1 + $0x24] sm:$0xf]
  %v33 = vld [vmem:[%s1 + $0x28] sm:$0xf]
  %v34 = vld [vmem:[%s1 + $0x2c] sm:$0xf]
  %v35 = vld [vmem:[%s1 + $0x30] sm:$0xf]
  %v36 = vld [vmem:[%s1 + $0x34] sm:$0xf]
  %v37 = vld [vmem:[%s1 + $0x38] sm:$0xf]
  %v38 = vld [vmem:[%s1 + $0x3c] sm:$0xf]
  %v41 = vunpack.c.l.b16 %v21
  %v42 = vunpack.c.l.b16 %v22
  %v43 = vpack.c.b16 %v42, %v41
  %v61 = vunpack.c.l.b16 %v23
  %v62 = vunpack.c.l.b16 %v24
  %v63 = vunpack.c.l.b16 %v25
  %v64 = vunpack.c.l.b16 %v26
  %v65 = vunpack.c.l.b16 %v27
  %v66 = vunpack.c.l.b16 %v28
  %v67 = vunpack.c.l.b16 %v29
  %v68 = vunpack.c.l.b16 %v30
  %v69 = vunpack.c.l.b16 %v31
  %v70 = vunpack.c.l.b16 %v32
  %v71 = vunpack.c.l.b16 %v33
  %v72 = vunpack.c.l.b16 %v34
  %v73 = vunpack.c.l.b16 %v35
  %v74 = vunpack.c.l.b16 %v36
  %v75 = vunpack.c.l.b16 %v37
  %v76 = vunpack.c.l.b16 %v38
  %v77 = vpack.c.b16 %v62, %v61
  %v78 = vpack.c.b16 %v64, %v63
  %v79 = vpack.c.b16 %v66, %v65
  %v80 = vpack.c.b16 %v68, %v67
  %v81 = vpack.c.b16 %v70, %v69
  %v82 = vpack.c.b16 %v72, %v71
  %v83 = vpack.c.b16 %v74, %v73
  %v84 = vpack.c.b16 %v76, %v75
  %93 = vmatprep.subr.bf16.mxu0 0
  %94 = vmatpush1.bf16.msra.mxu0 %v84
  %95 = vmatprep.subr.bf16.mxu0 0
  %96 = vmatpush1.bf16.msra.mxu0 %v83
  %97 = vmatprep.subr.bf16.mxu0 0
  %98 = vmatpush1.bf16.msra.mxu0 %v82
  %99 = vmatprep.subr.bf16.mxu0 0
  %100 = vmatpush1.bf16.msra.mxu0 %v81
  %101 = vmatprep.subr.bf16.mxu0 0
  %102 = vmatpush1.bf16.msra.mxu0 %v80
  %103 = vmatprep.subr.bf16.mxu0 0
  %104 = vmatpush1.bf16.msra.mxu0 %v79
  %105 = vmatprep.subr.bf16.mxu0 0
  %106 = vmatpush1.bf16.msra.mxu0 %v78
  %107 = vmatprep.subr.bf16.mxu0 0
  %108 = vmatpush1.bf16.msra.mxu0 %v77
  %109 = vmatprep.subr.bf16.mxu0 0
  %110 = vmatpush2.bf16.msra.mxu0 0
  %111 = vmatprep.subr.bf16.mxu0 0
  %112 = vmatpush2.bf16.msra.mxu0 0
  %113 = vmatprep.subr.bf16.mxu0 0
  %114 = vmatpush2.bf16.msra.mxu0 0
  %115 = vmatprep.subr.bf16.mxu0 0
  %116 = vmatpush2.bf16.msra.mxu0 0
  %117 = vmatprep.subr.bf16.mxu0 0
  %118 = vmatpush2.bf16.msra.mxu0 0
  %119 = vmatprep.subr.bf16.mxu0 0
  %120 = vmatpush2.bf16.msra.mxu0 0
  %121 = vmatprep.subr.bf16.mxu0 0
  %122 = vmatpush2.bf16.msra.mxu0 0
  %123 = vmatprep.subr.bf16.mxu0 0
  %124 = vmatpush2.bf16.msra.mxu0 0
  %125 = vmatprep.mubr.bf16.mxu0 0
  %126 = vmatmul.mubr.bf16.gmra.mxu0 %v43
  %v127 = vpop.f32.mrf.mxu0
  %v128 = vadd.f32 0.0, %v127
  %v129 = vpop.f32.mrf.mxu0
  %v130 = vpop.f32.mrf.mxu0
  %v131 = vadd.f32 0.0, %v130
  %v132 = vpop.f32.mrf.mxu0
  %133 = vdwg.mxu0
  %v134 = vpack.c.bf16 %v131, %v128
  %v136 = vunpack.c.l.b16 %v134
  %v137 = vunpack.c.h.b16 %v134
  %v138 = vpack.c.b16 %v136, %v136
  %v139 = vpack.c.b16 %v137, %v137
  %142 = vst [vmem:[%s4] sm:$0xf] %v138
  %143 = vst [vmem:[%s4 + $0x4] sm:$0xf] %v139
  %v144 = vld [vmem:[%s2] sm:$0xf]
  %v145 = vld [vmem:[%s2 + $0x4] sm:$0xf]
  %v146 = vld [vmem:[%s2 + $0x8] sm:$0xf]
  %v147 = vld [vmem:[%s2 + $0xc] sm:$0xf]
  %v148 = vld [vmem:[%s2 + $0x10] sm:$0xf]
  %v149 = vld [vmem:[%s2 + $0x14] sm:$0xf]
  %v150 = vld [vmem:[%s2 + $0x18] sm:$0xf]
  %v151 = vld [vmem:[%s2 + $0x1c] sm:$0xf]
  %v152 = vld [vmem:[%s2 + $0x20] sm:$0xf]
  %v153 = vld [vmem:[%s2 + $0x24] sm:$0xf]
  %v154 = vld [vmem:[%s2 + $0x28] sm:$0xf]
  %v155 = vld [vmem:[%s2 + $0x2c] sm:$0xf]
  %v156 = vld [vmem:[%s2 + $0x30] sm:$0xf]
  %v157 = vld [vmem:[%s2 + $0x34] sm:$0xf]
  %v158 = vld [vmem:[%s2 + $0x38] sm:$0xf]
  %v159 = vld [vmem:[%s2 + $0x3c] sm:$0xf]
  %v176 = vunpack.c.l.b16 %v144
  %v177 = vunpack.c.l.b16 %v145
  %v178 = vunpack.c.l.b16 %v146
  %v179 = vunpack.c.l.b16 %v147
  %v180 = vunpack.c.l.b16 %v148
  %v181 = vunpack.c.l.b16 %v149
  %v182 = vunpack.c.l.b16 %v150
  %v183 = vunpack.c.l.b16 %v151
  %v184 = vunpack.c.l.b16 %v152
  %v185 = vunpack.c.l.b16 %v153
  %v186 = vunpack.c.l.b16 %v154
  %v187 = vunpack.c.l.b16 %v155
  %v188 = vunpack.c.l.b16 %v156
  %v189 = vunpack.c.l.b16 %v157
  %v190 = vunpack.c.l.b16 %v158
  %v191 = vunpack.c.l.b16 %v159
  %v192 = vpack.c.b16 %v177, %v176
  %v193 = vpack.c.b16 %v179, %v178
  %v194 = vpack.c.b16 %v181, %v180
  %v195 = vpack.c.b16 %v183, %v182
  %v196 = vpack.c.b16 %v185, %v184
  %v197 = vpack.c.b16 %v187, %v186
  %v198 = vpack.c.b16 %v189, %v188
  %v199 = vpack.c.b16 %v191, %v190
  %208 = vmatprep.subr.bf16.mxu0 0
  %209 = vmatpush1.bf16.msra.mxu0 %v199
  %210 = vmatprep.subr.bf16.mxu0 0
  %211 = vmatpush1.bf16.msra.mxu0 %v198
  %212 = vmatprep.subr.bf16.mxu0 0
  %213 = vmatpush1.bf16.msra.mxu0 %v197
  %214 = vmatprep.subr.bf16.mxu0 0
  %215 = vmatpush1.bf16.msra.mxu0 %v196
  %216 = vmatprep.subr.bf16.mxu0 0
  %217 = vmatpush1.bf16.msra.mxu0 %v195
  %218 = vmatprep.subr.bf16.mxu0 0
  %219 = vmatpush1.bf16.msra.mxu0 %v194
  %220 = vmatprep.subr.bf16.mxu0 0
  %221 = vmatpush1.bf16.msra.mxu0 %v193
  %222 = vmatprep.subr.bf16.mxu0 0
  %223 = vmatpush1.bf16.msra.mxu0 %v192
  %224 = vmatprep.subr.bf16.mxu0 0
  %225 = vmatpush2.bf16.msra.mxu0 0
  %226 = vmatprep.subr.bf16.mxu0 0
  %227 = vmatpush2.bf16.msra.mxu0 0
  %228 = vmatprep.subr.bf16.mxu0 0
  %229 = vmatpush2.bf16.msra.mxu0 0
  %230 = vmatprep.subr.bf16.mxu0 0
  %231 = vmatpush2.bf16.msra.mxu0 0
  %232 = vmatprep.subr.bf16.mxu0 0
  %233 = vmatpush2.bf16.msra.mxu0 0
  %234 = vmatprep.subr.bf16.mxu0 0
  %235 = vmatpush2.bf16.msra.mxu0 0
  %236 = vmatprep.subr.bf16.mxu0 0
  %237 = vmatpush2.bf16.msra.mxu0 0
  %238 = vmatprep.subr.bf16.mxu0 0
  %239 = vmatpush2.bf16.msra.mxu0 0
  %240 = vmatprep.mubr.bf16.mxu0 0
  %241 = vmatmul.mubr.bf16.gmra.mxu0 %v43
  %v242 = vpop.f32.mrf.mxu0
  %v243 = vadd.f32 0.0, %v242
  %v244 = vpop.f32.mrf.mxu0
  %v245 = vpop.f32.mrf.mxu0
  %v246 = vadd.f32 0.0, %v245
  %v247 = vpop.f32.mrf.mxu0
  %248 = vdwg.mxu0
  %v249 = vpack.c.bf16 %v246, %v243
  %v251 = vunpack.c.l.b16 %v249
  %v252 = vunpack.c.h.b16 %v249
  %v253 = vpack.c.b16 %v251, %v251
  %v254 = vpack.c.b16 %v252, %v252
  %257 = vst [vmem:[%s5] sm:$0xf] %v253
  %258 = vst [vmem:[%s5 + $0x4] sm:$0xf] %v254
  %v259 = vld [vmem:[%s3] sm:$0xf]
  %v260 = vld [vmem:[%s3 + $0x4] sm:$0xf]
  %v261 = vld [vmem:[%s3 + $0x8] sm:$0xf]
  %v262 = vld [vmem:[%s3 + $0xc] sm:$0xf]
  %v263 = vld [vmem:[%s3 + $0x10] sm:$0xf]
  %v264 = vld [vmem:[%s3 + $0x14] sm:$0xf]
  %v265 = vld [vmem:[%s3 + $0x18] sm:$0xf]
  %v266 = vld [vmem:[%s3 + $0x1c] sm:$0xf]
  %v267 = vld [vmem:[%s3 + $0x20] sm:$0xf]
  %v268 = vld [vmem:[%s3 + $0x24] sm:$0xf]
  %v269 = vld [vmem:[%s3 + $0x28] sm:$0xf]
  %v270 = vld [vmem:[%s3 + $0x2c] sm:$0xf]
  %v271 = vld [vmem:[%s3 + $0x30] sm:$0xf]
  %v272 = vld [vmem:[%s3 + $0x34] sm:$0xf]
  %v273 = vld [vmem:[%s3 + $0x38] sm:$0xf]
  %v274 = vld [vmem:[%s3 + $0x3c] sm:$0xf]
  %v291 = vunpack.c.l.b16 %v259
  %v292 = vunpack.c.l.b16 %v260
  %v293 = vunpack.c.l.b16 %v261
  %v294 = vunpack.c.l.b16 %v262
  %v295 = vunpack.c.l.b16 %v263
  %v296 = vunpack.c.l.b16 %v264
  %v297 = vunpack.c.l.b16 %v265
  %v298 = vunpack.c.l.b16 %v266
  %v299 = vunpack.c.l.b16 %v267
  %v300 = vunpack.c.l.b16 %v268
  %v301 = vunpack.c.l.b16 %v269
  %v302 = vunpack.c.l.b16 %v270
  %v303 = vunpack.c.l.b16 %v271
  %v304 = vunpack.c.l.b16 %v272
  %v305 = vunpack.c.l.b16 %v273
  %v306 = vunpack.c.l.b16 %v274
  %v307 = vpack.c.b16 %v292, %v291
  %v308 = vpack.c.b16 %v294, %v293
  %v309 = vpack.c.b16 %v296, %v295
  %v310 = vpack.c.b16 %v298, %v297
  %v311 = vpack.c.b16 %v300, %v299
  %v312 = vpack.c.b16 %v302, %v301
  %v313 = vpack.c.b16 %v304, %v303
  %v314 = vpack.c.b16 %v306, %v305
  %323 = vmatprep.subr.bf16.mxu0 0
  %324 = vmatpush1.bf16.msra.mxu0 %v314
  %325 = vmatprep.subr.bf16.mxu0 0
  %326 = vmatpush1.bf16.msra.mxu0 %v313
  %327 = vmatprep.subr.bf16.mxu0 0
  %328 = vmatpush1.bf16.msra.mxu0 %v312
  %329 = vmatprep.subr.bf16.mxu0 0
  %330 = vmatpush1.bf16.msra.mxu0 %v311
  %331 = vmatprep.subr.bf16.mxu0 0
  %332 = vmatpush1.bf16.msra.mxu0 %v310
  %333 = vmatprep.subr.bf16.mxu0 0
  %334 = vmatpush1.bf16.msra.mxu0 %v309
  %335 = vmatprep.subr.bf16.mxu0 0
  %336 = vmatpush1.bf16.msra.mxu0 %v308
  %337 = vmatprep.subr.bf16.mxu0 0
  %338 = vmatpush1.bf16.msra.mxu0 %v307
  %339 = vmatprep.subr.bf16.mxu0 0
  %340 = vmatpush2.bf16.msra.mxu0 0
  %341 = vmatprep.subr.bf16.mxu0 0
  %342 = vmatpush2.bf16.msra.mxu0 0
  %343 = vmatprep.subr.bf16.mxu0 0
  %344 = vmatpush2.bf16.msra.mxu0 0
  %345 = vmatprep.subr.bf16.mxu0 0
  %346 = vmatpush2.bf16.msra.mxu0 0
  %347 = vmatprep.subr.bf16.mxu0 0
  %348 = vmatpush2.bf16.msra.mxu0 0
  %349 = vmatprep.subr.bf16.mxu0 0
  %350 = vmatpush2.bf16.msra.mxu0 0
  %351 = vmatprep.subr.bf16.mxu0 0
  %352 = vmatpush2.bf16.msra.mxu0 0
  %353 = vmatprep.subr.bf16.mxu0 0
  %354 = vmatpush2.bf16.msra.mxu0 0
  %355 = vmatprep.mubr.bf16.mxu0 0
  %356 = vmatmul.mubr.bf16.gmra.mxu0 %v43
  %v357 = vpop.f32.mrf.mxu0
  %v358 = vadd.f32 0.0, %v357
  %v359 = vpop.f32.mrf.mxu0
  %v360 = vpop.f32.mrf.mxu0
  %v361 = vadd.f32 0.0, %v360
  %v362 = vpop.f32.mrf.mxu0
  %363 = vdwg.mxu0
  %v364 = vpack.c.bf16 %v361, %v358
  %v366 = vunpack.c.l.b16 %v364
  %v367 = vunpack.c.h.b16 %v364
  %v368 = vpack.c.b16 %v366, %v366
  %v369 = vpack.c.b16 %v367, %v367
  %372 = vst [vmem:[%s6] sm:$0xf] %v368
  %373 = vst [vmem:[%s6 + $0x4] sm:$0xf] %v369
  // Predicated region
  $region18: #{_self_attention_v2_impl.2} parent=0 // pred_check
    _
  $region19: #{_self_attention_v2_impl.2} parent=0 // pred_check_branch
    %375 = sbr.rel (0) target = $region21
  $region20: #{_self_attention_v2_impl.2} parent=0 // pred_region
    _
  $region21: #{_self_attention_v2_impl.2} parent=0 // pred_fallthru
    _
  // Predicated region
  $region22: #{_self_attention_v2_impl.2} parent=0 // pred_check
    _
  $region23: #{_self_attention_v2_impl.2} parent=0 // pred_check_branch
    %377 = sbr.rel (0) target = $region25
  $region24: #{_self_attention_v2_impl.2} parent=0 // pred_region
    _
  $region25: #{_self_attention_v2_impl.2} parent=0 // pred_fallthru
    _
  // Predicated region
  $region26: #{_self_attention_v2_impl.2} parent=0 // pred_check
    _
  $region27: #{_self_attention_v2_impl.2} parent=0 // pred_check_branch
    %379 = sbr.rel (0) target = $region29
  $region28: #{_self_attention_v2_impl.2} parent=0 // pred_region
    _
  $region29: #{_self_attention_v2_impl.2} parent=0 // pred_fallthru
    _
  // Predicated region
  $region30: #{_self_attention_v2_impl.2} parent=0 // pred_check
    _
  $region31: #{_self_attention_v2_impl.2} parent=0 // pred_check_branch
    %381 = sbr.rel (0) target = $region33
  $region32: #{_self_attention_v2_impl.2} parent=0 // pred_region
    _
  $region33: #{_self_attention_v2_impl.2} parent=0 // pred_fallthru
    _
  // Predicated region
  $region34: #{_self_attention_v2_impl.2} parent=0 // pred_check
    _
  $region35: #{_self_attention_v2_impl.2} parent=0 // pred_check_branch
    %383 = sbr.rel (0) target = $region37
  $region36: #{_self_attention_v2_impl.2} parent=0 // pred_region
    _
  $region37: #{_self_attention_v2_impl.2} parent=0 // pred_fallthru
    _
  // Predicated region
  $region38: #{_self_attention_v2_impl.2} parent=0 // pred_check
    _
  $region39: #{_self_attention_v2_impl.2} parent=0 // pred_check_branch
    %385 = sbr.rel (0) target = $region41
  $region40: #{_self_attention_v2_impl.2} parent=0 // pred_region
    _
  $region41: #{_self_attention_v2_impl.2} parent=0 // pred_fallthru
    _

</llo_original>
